<compile_context>
chip_gen: v5e
topology: v5e:2x2
jax: 0.10.0
libtpu: 0.0.40
codegen_flags: <defaults>
</compile_context>

<pallas_src>
import functools

import jax
import jax.numpy as jnp
from jax.experimental import pallas as pl
from jax.experimental.pallas import tpu as pltpu


def _mirt_kernel(uid_ref, iid_ref, score_ref,        # (1, TB) per-tile inputs
                 uembT_ref, aembT_ref, brow_ref,     # resident (transposed) tables
                 pred_ref, loss_ref,                 # (1, TB) lane-dense outputs
                 *, batch_size, tile):
    i = pl.program_id(0)

    uid = uid_ref[...]                                # (1, TB) int32
    iid = iid_ref[...]                                # (1, TB) int32

    num_users = uembT_ref.shape[1]
    num_items = aembT_ref.shape[1]

    # --- gather rows via one-hot matmul on the MXU (tables resident in VMEM) ---
    u_rows = jax.lax.broadcasted_iota(jnp.int32, (num_users, tile), 0)
    onehot_u = (u_rows == uid).astype(jnp.float32)                    # (U, TB)
    theta_t = jnp.dot(uembT_ref[...].astype(jnp.float32), onehot_u,
                      preferred_element_type=jnp.float32)             # (L, TB)

    i_rows = jax.lax.broadcasted_iota(jnp.int32, (num_items, tile), 0)
    onehot_i = (i_rows == iid).astype(jnp.float32)                    # (I, TB)
    alpha_t = jnp.dot(aembT_ref[...].astype(jnp.float32), onehot_i,
                      preferred_element_type=jnp.float32)             # (L, TB)
    beta = jnp.dot(brow_ref[...].astype(jnp.float32), onehot_i,
                   preferred_element_type=jnp.float32)                # (1, TB)

    # --- pred = sigmoid( sum_L(alpha * theta) - beta ), batch on lanes ---------
    logit = jnp.sum(alpha_t * theta_t, axis=0, keepdims=True) - beta  # (1, TB)
    p = jax.nn.sigmoid(logit)
    pred_ref[...] = p

    # --- per-sample BCE terms (PyTorch BCELoss: log terms clamped at -100) -----
    y = score_ref[...].astype(jnp.float32)                            # (1, TB)
    logp = jnp.maximum(jnp.log(p), -100.0)
    log1mp = jnp.maximum(jnp.log(1.0 - p), -100.0)
    term = -(y * logp + (1.0 - y) * log1mp)

    # mask samples beyond the true batch (padded last tile contributes 0)
    lane = jax.lax.broadcasted_iota(jnp.int32, (1, tile), 1)
    valid = (i * tile + lane) < batch_size
    loss_ref[...] = jnp.where(valid, term, 0.0)


@functools.partial(jax.jit, static_argnames=("tile",))
def mirt_forward(user_id, item_id, score, user_emb, a_emb, b_emb, tile=128):
    """Returns (prediction (B,), loss scalar) matching MIRT.forward semantics."""
    B = user_id.shape[0]
    U, L = user_emb.shape
    I = a_emb.shape[0]

    bp = ((B + tile - 1) // tile) * tile              # batch padded to tile
    num_tiles = bp // tile

    # lane-dense (1, Bp) layouts; pad ids with 0 (a valid row) and score with 0
    uid = jnp.zeros((1, bp), jnp.int32).at[0, :B].set(user_id.astype(jnp.int32))
    iid = jnp.zeros((1, bp), jnp.int32).at[0, :B].set(item_id.astype(jnp.int32))
    sc = jnp.zeros((1, bp), jnp.float32).at[0, :B].set(score.astype(jnp.float32))

    # transposed tables: latent on sublanes, entity index on lanes
    uemb_t = user_emb.astype(jnp.float32).T           # (L, U)
    aemb_t = a_emb.astype(jnp.float32).T              # (L, I)
    brow = b_emb.astype(jnp.float32).T                # (1, I)

    kernel = functools.partial(_mirt_kernel, batch_size=B, tile=tile)

    pred_p, loss_terms = pl.pallas_call(
        kernel,
        grid=(num_tiles,),
        in_specs=[
            pl.BlockSpec((1, tile), lambda i: (0, i)),   # user_id tile
            pl.BlockSpec((1, tile), lambda i: (0, i)),   # item_id tile
            pl.BlockSpec((1, tile), lambda i: (0, i)),   # score tile
            pl.BlockSpec((L, U), lambda i: (0, 0)),      # user_emb^T (resident)
            pl.BlockSpec((L, I), lambda i: (0, 0)),      # a_emb^T (resident)
            pl.BlockSpec((1, I), lambda i: (0, 0)),      # b_emb^T (resident)
        ],
        out_specs=[
            pl.BlockSpec((1, tile), lambda i: (0, i)),   # prediction (lane-dense)
            pl.BlockSpec((1, tile), lambda i: (0, i)),   # per-sample loss terms
        ],
        out_shape=(
            jax.ShapeDtypeStruct((1, bp), jnp.float32),
            jax.ShapeDtypeStruct((1, bp), jnp.float32),
        ),
        compiler_params=pltpu.CompilerParams(
            dimension_semantics=("parallel",)),
    )(uid, iid, sc, uemb_t, aemb_t, brow)

    pred = pred_p[0, :B]
    loss = jnp.sum(loss_terms) / jnp.float32(B)       # mean over true samples
    return pred, loss


def xavier_uniform(key, shape):
    fan_in, fan_out = shape[0], shape[1]
    bound = (6.0 / (fan_in + fan_out)) ** 0.5
    return jax.random.uniform(key, shape, jnp.float32, -bound, bound)


def mirt_reference(user_id, item_id, score, user_emb, a_emb, b_emb):
    theta = user_emb[user_id]
    alpha = a_emb[item_id]
    beta = b_emb[item_id]
    logit = jnp.sum(alpha * theta, axis=1, keepdims=True) - beta
    pred = jax.nn.sigmoid(logit)[:, 0]
    logp = jnp.maximum(jnp.log(pred), -100.0)
    log1mp = jnp.maximum(jnp.log(1.0 - pred), -100.0)
    loss = jnp.mean(-(score * logp + (1.0 - score) * log1mp))
    return pred, loss


if __name__ == "__main__":
    USER_NUM, ITEM_NUM, LATENT_NUM = 20, 15, 32
    B = 8

    key = jax.random.PRNGKey(0)
    k_u, k_a, k_b, k_uid, k_iid, k_s = jax.random.split(key, 6)

    # Deterministic synthetic parameters (xavier_uniform, as in nn.init).
    user_emb = xavier_uniform(k_u, (USER_NUM, LATENT_NUM))
    a_emb = xavier_uniform(k_a, (ITEM_NUM, LATENT_NUM))
    b_emb = xavier_uniform(k_b, (ITEM_NUM, 1))

    user_id = jax.random.randint(k_uid, (B,), 0, USER_NUM, dtype=jnp.int32)
    item_id = jax.random.randint(k_iid, (B,), 0, ITEM_NUM, dtype=jnp.int32)
    score = jax.random.bernoulli(k_s, 0.5, (B,)).astype(jnp.float32)

    pred, loss = mirt_forward(user_id, item_id, score, user_emb, a_emb, b_emb)
    jax.block_until_ready((pred, loss))

    pred_ref, loss_ref = mirt_reference(user_id, item_id, score,
                                        user_emb, a_emb, b_emb)
    assert pred.shape == (B,)
    assert jnp.allclose(pred, pred_ref, rtol=1e-5, atol=1e-5)
    assert jnp.allclose(loss, loss_ref, rtol=1e-5, atol=1e-5)

    print("KERNEL_OK")
</pallas_src>

<mosaic_0001>
module attributes {stable_mosaic.version = 11 : i64} {
  func.func @_mirt_kernel(%arg0: i32, %arg1: memref<1x128xi32, #tpu.memory_space<vmem>>, %arg2: memref<1x128xi32, #tpu.memory_space<vmem>>, %arg3: memref<1x128xf32, #tpu.memory_space<vmem>>, %arg4: memref<32x20xf32, #tpu.memory_space<vmem>>, %arg5: memref<32x15xf32, #tpu.memory_space<vmem>>, %arg6: memref<1x15xf32, #tpu.memory_space<vmem>>, %arg7: memref<1x128xf32, #tpu.memory_space<vmem>>, %arg8: memref<1x128xf32, #tpu.memory_space<vmem>>) attributes {dimension_semantics = [#tpu.dimension_semantics<parallel>], iteration_bounds = array<i64: 1>, scalar_prefetch = 0 : i64, scratch_operands = 0 : i64, tpu.core_type = #tpu.core_type<tc>, window_params = [{transform_indices = @transform_0, window_bounds = array<i64: 1, 128>}, {transform_indices = @transform_1, window_bounds = array<i64: 1, 128>}, {transform_indices = @transform_2, window_bounds = array<i64: 1, 128>}, {pipeline_mode = #tpu.pipeline_mode<synchronous>, transform_indices = @transform_3, window_bounds = array<i64: 32, 20>}, {pipeline_mode = #tpu.pipeline_mode<synchronous>, transform_indices = @transform_4, window_bounds = array<i64: 32, 15>}, {pipeline_mode = #tpu.pipeline_mode<synchronous>, transform_indices = @transform_5, window_bounds = array<i64: 1, 15>}, {transform_indices = @transform_6, window_bounds = array<i64: 1, 128>}, {transform_indices = @transform_7, window_bounds = array<i64: 1, 128>}]} {
    %c0 = arith.constant 0 : index
    %c0_0 = arith.constant 0 : index
    %0 = vector.load %arg1[%c0, %c0_0] : memref<1x128xi32, #tpu.memory_space<vmem>>, vector<1x128xi32>
    %c0_1 = arith.constant 0 : index
    %c0_2 = arith.constant 0 : index
    %1 = vector.load %arg2[%c0_1, %c0_2] : memref<1x128xi32, #tpu.memory_space<vmem>>, vector<1x128xi32>
    %2 = tpu.iota {dimensions = array<i32: 0>} : vector<20x128xi32>
    %3 = vector.broadcast %0 : vector<1x128xi32> to vector<20x128xi32>
    %4 = arith.cmpi eq, %2, %3 : vector<20x128xi32>
    %5 = arith.extui %4 : vector<20x128xi1> to vector<20x128xi32>
    %6 = arith.sitofp %5 : vector<20x128xi32> to vector<20x128xf32>
    %c0_3 = arith.constant 0 : index
    %c0_4 = arith.constant 0 : index
    %7 = vector.load %arg4[%c0_3, %c0_4] : memref<32x20xf32, #tpu.memory_space<vmem>>, vector<32x20xf32>
    %cst = arith.constant dense<0.000000e+00> : vector<32x128xf32>
    %8 = tpu.matmul %7, %6, %cst {dimension_numbers = #tpu.dot_dimension_numbers<[1], [0], [0], [1], [0, 0, 1, 1], [], []>} : vector<32x20xf32>, vector<20x128xf32>, vector<32x128xf32> -> vector<32x128xf32>
    %9 = tpu.iota {dimensions = array<i32: 0>} : vector<15x128xi32>
    %10 = vector.broadcast %1 : vector<1x128xi32> to vector<15x128xi32>
    %11 = arith.cmpi eq, %9, %10 : vector<15x128xi32>
    %12 = arith.extui %11 : vector<15x128xi1> to vector<15x128xi32>
    %13 = arith.sitofp %12 : vector<15x128xi32> to vector<15x128xf32>
    %c0_5 = arith.constant 0 : index
    %c0_6 = arith.constant 0 : index
    %14 = vector.load %arg5[%c0_5, %c0_6] : memref<32x15xf32, #tpu.memory_space<vmem>>, vector<32x15xf32>
    %cst_7 = arith.constant dense<0.000000e+00> : vector<32x128xf32>
    %15 = tpu.matmul %14, %13, %cst_7 {dimension_numbers = #tpu.dot_dimension_numbers<[1], [0], [0], [1], [0, 0, 1, 1], [], []>} : vector<32x15xf32>, vector<15x128xf32>, vector<32x128xf32> -> vector<32x128xf32>
    %c0_8 = arith.constant 0 : index
    %c0_9 = arith.constant 0 : index
    %16 = vector.load %arg6[%c0_8, %c0_9] : memref<1x15xf32, #tpu.memory_space<vmem>>, vector<1x15xf32>
    %cst_10 = arith.constant dense<0.000000e+00> : vector<1x128xf32>
    %17 = tpu.matmul %16, %13, %cst_10 {dimension_numbers = #tpu.dot_dimension_numbers<[1], [0], [0], [1], [0, 0, 1, 1], [], []>} : vector<1x15xf32>, vector<15x128xf32>, vector<1x128xf32> -> vector<1x128xf32>
    %18 = arith.mulf %15, %8 : vector<32x128xf32>
    %cst_11 = arith.constant dense<0.000000e+00> : vector<128xf32>
    %19 = vector.multi_reduction <add>, %18, %cst_11 [0] : vector<32x128xf32> to vector<128xf32>
    %20 = vector.shape_cast %19 : vector<128xf32> to vector<1x128xf32>
    %21 = arith.subf %20, %17 : vector<1x128xf32>
    %22 = arith.negf %21 : vector<1x128xf32>
    %23 = math.exp %22 : vector<1x128xf32>
    %cst_12 = arith.constant 1.000000e+00 : f32
    %24 = vector.broadcast %cst_12 : f32 to vector<1x128xf32>
    %25 = arith.addf %24, %23 : vector<1x128xf32>
    %26 = arith.divf %24, %25 : vector<1x128xf32>
    %c0_13 = arith.constant 0 : index
    %c0_14 = arith.constant 0 : index
    %27 = vector.load %arg7[%c0_13, %c0_14] : memref<1x128xf32, #tpu.memory_space<vmem>>, vector<1x128xf32>
    tpu.vector_store %arg7[%c0_13, %c0_14], %26 {strides = array<i32>} : memref<1x128xf32, #tpu.memory_space<vmem>>, vector<1x128xf32>,
    %c0_15 = arith.constant 0 : index
    %c0_16 = arith.constant 0 : index
    %28 = vector.load %arg3[%c0_15, %c0_16] : memref<1x128xf32, #tpu.memory_space<vmem>>, vector<1x128xf32>
    %29 = math.log %26 : vector<1x128xf32>
    %cst_17 = arith.constant -1.000000e+02 : f32
    %30 = vector.broadcast %cst_17 : f32 to vector<1x128xf32>
    %31 = arith.maximumf %29, %30 : vector<1x128xf32>
    %cst_18 = arith.constant 1.000000e+00 : f32
    %32 = vector.broadcast %cst_18 : f32 to vector<1x128xf32>
    %33 = arith.subf %32, %26 : vector<1x128xf32>
    %34 = math.log %33 : vector<1x128xf32>
    %cst_19 = arith.constant -1.000000e+02 : f32
    %35 = vector.broadcast %cst_19 : f32 to vector<1x128xf32>
    %36 = arith.maximumf %34, %35 : vector<1x128xf32>
    %37 = arith.mulf %28, %31 : vector<1x128xf32>
    %cst_20 = arith.constant 1.000000e+00 : f32
    %38 = vector.broadcast %cst_20 : f32 to vector<1x128xf32>
    %39 = arith.subf %38, %28 : vector<1x128xf32>
    %40 = arith.mulf %39, %36 : vector<1x128xf32>
    %41 = arith.addf %37, %40 : vector<1x128xf32>
    %cst_21 = arith.constant 0.000000e+00 : f32
    %42 = vector.broadcast %cst_21 : f32 to vector<1x128xf32>
    %43 = arith.subf %42, %41 : vector<1x128xf32>
    %44 = tpu.iota {dimensions = array<i32: 1>} : vector<1x128xi32>
    %c128_i32 = arith.constant 128 : i32
    %45 = arith.muli %arg0, %c128_i32 : i32
    %46 = vector.broadcast %45 : i32 to vector<1x128xi32>
    %47 = arith.addi %46, %44 : vector<1x128xi32>
    %c8_i32 = arith.constant 8 : i32
    %48 = vector.broadcast %c8_i32 : i32 to vector<1x128xi32>
    %49 = arith.cmpi slt, %47, %48 : vector<1x128xi32>
    %cst_22 = arith.constant 0.000000e+00 : f32
    %50 = vector.broadcast %cst_22 : f32 to vector<1x128xf32>
    %51 = arith.select %49, %43, %50 : vector<1x128xi1>, vector<1x128xf32>
    %c0_23 = arith.constant 0 : index
    %c0_24 = arith.constant 0 : index
    %52 = vector.load %arg8[%c0_23, %c0_24] : memref<1x128xf32, #tpu.memory_space<vmem>>, vector<1x128xf32>
    tpu.vector_store %arg8[%c0_23, %c0_24], %51 {strides = array<i32>} : memref<1x128xf32, #tpu.memory_space<vmem>>, vector<1x128xf32>,
    return
  }
  func.func @transform_0(%arg0: i32) -> (i32, i32) {
    %c0_i32 = arith.constant 0 : i32
    %c0_i32_0 = arith.constant 0 : i32
    return %c0_i32, %arg0 : i32, i32
  }
  func.func @transform_1(%arg0: i32) -> (i32, i32) {
    %c0_i32 = arith.constant 0 : i32
    %c0_i32_0 = arith.constant 0 : i32
    return %c0_i32, %arg0 : i32, i32
  }
  func.func @transform_2(%arg0: i32) -> (i32, i32) {
    %c0_i32 = arith.constant 0 : i32
    %c0_i32_0 = arith.constant 0 : i32
    return %c0_i32, %arg0 : i32, i32
  }
  func.func @transform_3(%arg0: i32) -> (i32, i32) {
    %c0_i32 = arith.constant 0 : i32
    %c0_i32_0 = arith.constant 0 : i32
    %c0_i32_1 = arith.constant 0 : i32
    return %c0_i32, %c0_i32_0 : i32, i32
  }
  func.func @transform_4(%arg0: i32) -> (i32, i32) {
    %c0_i32 = arith.constant 0 : i32
    %c0_i32_0 = arith.constant 0 : i32
    %c0_i32_1 = arith.constant 0 : i32
    return %c0_i32, %c0_i32_0 : i32, i32
  }
  func.func @transform_5(%arg0: i32) -> (i32, i32) {
    %c0_i32 = arith.constant 0 : i32
    %c0_i32_0 = arith.constant 0 : i32
    %c0_i32_1 = arith.constant 0 : i32
    return %c0_i32, %c0_i32_0 : i32, i32
  }
  func.func @transform_6(%arg0: i32) -> (i32, i32) {
    %c0_i32 = arith.constant 0 : i32
    %c0_i32_0 = arith.constant 0 : i32
    return %c0_i32, %arg0 : i32, i32
  }
  func.func @transform_7(%arg0: i32) -> (i32, i32) {
    %c0_i32 = arith.constant 0 : i32
    %c0_i32_0 = arith.constant 0 : i32
    return %c0_i32, %arg0 : i32, i32
  }
}

</mosaic_0001>

<llo_original>
// kernel: mirt_forward.1
$region0: #{mirt_forward.1}
  #allocation0 [shape = 'u32[]', space=smem, size = 0x4, offset = 0x4, fixed_abs, tag = 'smem constant byte address 0x4 - core index']
  #allocation1 [shape = 'u32[72,128]{1,0:T(1,128)}', space=vmem, size = 0x9000, scoped, tag = 'internal scratch']
  %s0 = inlined_call_operand.vmem [shape: s32[1,128], index: 0, kind: input, shape index: {}]
  %s1 = inlined_call_operand.vmem [shape: s32[1,128], index: 1, kind: input, shape index: {}]
  %s2 = inlined_call_operand.vmem [shape: f32[1,128], index: 2, kind: input, shape index: {}]
  %s3 = inlined_call_operand.vmem [shape: f32[32,20], index: 3, kind: input, shape index: {}]
  %s4 = inlined_call_operand.vmem [shape: f32[32,15], index: 4, kind: input, shape index: {}]
  %s5 = inlined_call_operand.vmem [shape: f32[1,15], index: 5, kind: input, shape index: {}]
  %s6 = inlined_call_operand.vmem [shape: f32[1,128], index: 6, kind: output, shape index: {0}]
  %s7 = inlined_call_operand.vmem [shape: f32[1,128], index: 7, kind: output, shape index: {1}]
  %8 = xla_tuple %s6, %s7
  %s9 = sld [smem:[#allocation0]]
  $region42: #{mirt_forward.1} parent=0
    _
  %s11 = ssub.s32 1, %s9
  %s12 = scalar_select 0, %s11, %s9
  // Predicated region
  $region2: #{mirt_forward.1} parent=0 // pred_check
    _
  $region3: #{mirt_forward.1} parent=0 // pred_check_branch
    %14 = sbr.rel (0) target = $region5
  $region4: #{mirt_forward.1} parent=0 // pred_region
    _
  $region5: #{mirt_forward.1} parent=0 // pred_fallthru
    _
  // Predicated region
  $region6: #{mirt_forward.1} parent=0 // pred_check
    _
  $region7: #{mirt_forward.1} parent=0 // pred_check_branch
    %16 = sbr.rel (0) target = $region9
  $region8: #{mirt_forward.1} parent=0 // pred_region
    _
  $region9: #{mirt_forward.1} parent=0 // pred_fallthru
    _
  // Predicated region
  $region10: #{mirt_forward.1} parent=0 // pred_check
    _
  $region11: #{mirt_forward.1} parent=0 // pred_check_branch
    %18 = sbr.rel (0) target = $region13
  $region12: #{mirt_forward.1} parent=0 // pred_region
    _
  $region13: #{mirt_forward.1} parent=0 // pred_fallthru
    _
  // Predicated region
  $region14: #{mirt_forward.1} parent=0 // pred_check
    _
  $region15: #{mirt_forward.1} parent=0 // pred_check_branch
    %20 = sbr.rel (0) target = $region17
  $region16: #{mirt_forward.1} parent=0 // pred_region
    _
  $region17: #{mirt_forward.1} parent=0 // pred_fallthru
    _
  // Predicated region
  $region18: #{mirt_forward.1} parent=0 // pred_check
    _
  $region19: #{mirt_forward.1} parent=0 // pred_check_branch
    %22 = sbr.rel (0) target = $region21
  $region20: #{mirt_forward.1} parent=0 // pred_region
    _
  $region21: #{mirt_forward.1} parent=0 // pred_fallthru
    _
  // Predicated region
  $region22: #{mirt_forward.1} parent=0 // pred_check
    _
  $region23: #{mirt_forward.1} parent=0 // pred_check_branch
    %24 = sbr.rel (0) target = $region25
  $region24: #{mirt_forward.1} parent=0 // pred_region
    _
  $region25: #{mirt_forward.1} parent=0 // pred_fallthru
    _
  %v25 = vld [vmem:[%s0] sm:$0x1]
  %v26 = vld [vmem:[%s1] sm:$0x1]
  %v27 = vlaneseq
  %v28 = vshrl.u32 %v27, 7
  %v29 = vadd.s32 %v28, 8
  %v30 = vadd.s32 %v28, 16
  %v31 = vperm.slane %v25, 0
  %vm32 = vcmp.eq.s32.totalorder %v28, %v31
  %vm33 = vcmp.eq.s32.totalorder %v29, %v31
  %vm34 = vcmp.eq.s32.totalorder %v30, %v31
  %v35 = vsel %vm32, 1, 0
  %v36 = vsel %vm33, 1, 0
  %v37 = vsel %vm34, 1, 0
  %v38 = vcvt.s32.f32 %v35
  %v39 = vcvt.s32.f32 %v36
  %v40 = vcvt.s32.f32 %v37
  %v41 = vld [vmem:[%s3] sm:$0xff]
  %v42 = vld [vmem:[%s3 + $0x8] sm:$0xff]
  %v43 = vld [vmem:[%s3 + $0x10] sm:$0xff]
  %v44 = vld [vmem:[%s3 + $0x18] sm:$0xff]
  %vm45 = vcmask 162816
  %v47 = vsel %vm45, %v41, 0
  %v50 = vsel %vm45, %v42, 0
  %v53 = vsel %vm45, %v43, 0
  %v56 = vsel %vm45, %v44, 0
  %vm58 = vcmask 1043456
  %v60 = vsel %vm58, %v40, 0
  %62 = vmatpush.msra.mxu0 0.0
  %63 = vmatpush.msra.mxu0 0.0
  %64 = vmatpush.msra.mxu0 0.0
  %65 = vmatpush.msra.mxu0 0.0
  %66 = vmatpush.msra.mxu0 0.0
  %67 = vmatpush.msra.mxu0 0.0
  %68 = vmatpush.msra.mxu0 0.0
  %69 = vmatpush.msra.mxu0 0.0
  %70 = vmatpush.msra.mxu0 0.0
  %71 = vmatpush.msra.mxu0 0.0
  %72 = vmatpush.msra.mxu0 0.0
  %73 = vmatpush.msra.mxu0 0.0
  %74 = vmatpush.msra.mxu0 0.0
  %75 = vmatpush.msra.mxu0 %v60
  %76 = vmatpush.msra.mxu0 %v39
  %77 = vmatpush.msra.mxu0 %v38
  %78 = vmatmul.f32.gmra.mxu0 %v47
  %v79 = vpop.f32.mrf.mxu0
  %v80 = vadd.f32 0.0, %v79
  %81 = vmatmul.f32.gmra.mxu0 %v50
  %v82 = vpop.f32.mrf.mxu0
  %v83 = vadd.f32 0.0, %v82
  %84 = vmatmul.f32.gmra.mxu0 %v53
  %v85 = vpop.f32.mrf.mxu0
  %v86 = vadd.f32 0.0, %v85
  %87 = vmatmul.f32.gmra.mxu0 %v56
  %v88 = vpop.f32.mrf.mxu0
  %v89 = vadd.f32 0.0, %v88
  %90 = vdwg.mxu0
  %v91 = vperm.slane %v26, 0
  %vm92 = vcmp.eq.s32.totalorder %v28, %v91
  %vm93 = vcmp.eq.s32.totalorder %v29, %v91
  %v94 = vsel %vm92, 1, 0
  %v95 = vsel %vm93, 1, 0
  %v96 = vcvt.s32.f32 %v94
  %v97 = vcvt.s32.f32 %v95
  %v98 = vld [vmem:[%s4] sm:$0xff]
  %v99 = vld [vmem:[%s4 + $0x8] sm:$0xff]
  %v100 = vld [vmem:[%s4 + $0x10] sm:$0xff]
  %v101 = vld [vmem:[%s4 + $0x18] sm:$0xff]
  %vm102 = vcmask 121856
  %v104 = vsel %vm102, %v98, 0
  %v107 = vsel %vm102, %v99, 0
  %v110 = vsel %vm102, %v100, 0
  %v113 = vsel %vm102, %v101, 0
  %vm115 = vcmask 1046528
  %v117 = vsel %vm115, %v97, 0
  %119 = vmatpush.msra.mxu0 0.0
  %120 = vmatpush.msra.mxu0 0.0
  %121 = vmatpush.msra.mxu0 0.0
  %122 = vmatpush.msra.mxu0 0.0
  %123 = vmatpush.msra.mxu0 0.0
  %124 = vmatpush.msra.mxu0 0.0
  %125 = vmatpush.msra.mxu0 0.0
  %126 = vmatpush.msra.mxu0 0.0
  %127 = vmatpush.msra.mxu0 0.0
  %128 = vmatpush.msra.mxu0 0.0
  %129 = vmatpush.msra.mxu0 0.0
  %130 = vmatpush.msra.mxu0 0.0
  %131 = vmatpush.msra.mxu0 0.0
  %132 = vmatpush.msra.mxu0 0.0
  %133 = vmatpush.msra.mxu0 %v117
  %134 = vmatpush.msra.mxu0 %v96
  %135 = vmatmul.f32.gmra.mxu0 %v104
  %v136 = vpop.f32.mrf.mxu0
  %v137 = vadd.f32 0.0, %v136
  %138 = vmatmul.f32.gmra.mxu0 %v107
  %v139 = vpop.f32.mrf.mxu0
  %v140 = vadd.f32 0.0, %v139
  %141 = vmatmul.f32.gmra.mxu0 %v110
  %v142 = vpop.f32.mrf.mxu0
  %v143 = vadd.f32 0.0, %v142
  %144 = vmatmul.f32.gmra.mxu0 %v113
  %v145 = vpop.f32.mrf.mxu0
  %v146 = vadd.f32 0.0, %v145
  %147 = vdwg.mxu0
  %v148 = vld [vmem:[%s5] sm:$0x1]
  %v150 = vsel %vm102, %v148, 0
  %152 = vmatpush.msra.mxu0 0.0
  %153 = vmatpush.msra.mxu0 0.0
  %154 = vmatpush.msra.mxu0 0.0
  %155 = vmatpush.msra.mxu0 0.0
  %156 = vmatpush.msra.mxu0 0.0
  %157 = vmatpush.msra.mxu0 0.0
  %158 = vmatpush.msra.mxu0 0.0
  %159 = vmatpush.msra.mxu0 0.0
  %160 = vmatpush.msra.mxu0 0.0
  %161 = vmatpush.msra.mxu0 0.0
  %162 = vmatpush.msra.mxu0 0.0
  %163 = vmatpush.msra.mxu0 0.0
  %164 = vmatpush.msra.mxu0 0.0
  %165 = vmatpush.msra.mxu0 0.0
  %166 = vmatpush.msra.mxu0 %v117
  %167 = vmatpush.msra.mxu0 %v96
  %168 = vmatmul.f32.gmra.mxu0 %v150
  %v169 = vpop.f32.mrf.mxu0
  %v170 = vadd.f32 0.0, %v169
  %171 = vdwg.mxu0
  %v172 = vmul.f32 %v137, %v80
  %v173 = vmul.f32 %v140, %v83
  %v174 = vmul.f32 %v143, %v86
  %v175 = vmul.f32 %v146, %v89
  %v176 = vadd.f32 %v172, %v173
  %v177 = vadd.f32 %v176, %v174
  %v178 = vadd.f32 %v177, %v175
  %v179 = vrot.slane %v178, 4
  %v180 = vadd.f32 %v178, %v179
  %v181 = vrot.slane %v180, 2
  %v182 = vadd.f32 %v180, %v181
  %v183 = vrot.slane %v182, 1
  %v184 = vadd.f32 %v182, %v183
  %v185 = vsub.f32 %v184, %v170
  %v186 = vxor.u32 %v185, 2147483648
  %v187 = vmul.f32 %v186, 1.442695
  %v188 = vpow.pop %v187
  %v189 = vadd.f32 %v188, 1.0
  %v190 = vrcp.pop %v189
  %v191 = vmul.f32 %v189, %v190
  %v192 = vsub.f32 1.0, %v191
  %v193 = vmul.f32 %v190, %v192
  %v194 = vadd.f32 %v190, %v193
  %vm195 = vweird.f32 %v189
  %vm196 = vweird.f32 %v190
  %vm197 = vmor %vm195, %vm196
  %v198 = vsel %vm197, %v190, %v194
  %v199 = vand.u32 2147483647, %v189
  %vm200 = vcmp.eq.f32.partialorder %v199, 8.507059e+37
  %v201 = vand.u32 %v189, 2147483648
  %v202 = vor.u32 1.1754944e-38, %v201
  %v203 = vsel %vm200, %v202, %v198
  %v204 = vmul.f32 1.0, %v203
  %205 = vst [vmem:[%s6] sm:$0x1] %v204
  %v206 = vld [vmem:[%s2] sm:$0x1]
  %v207 = vlog2.pop %v204
  %v208 = vmul.f32 %v207, 0.6931472
  %v209 = vmax.f32 %v208, -100.0
  %v210 = vsub.f32 1.0, %v204
  %v211 = vlog2.pop %v210
  %v212 = vmul.f32 %v211, 0.6931472
  %v213 = vmax.f32 %v212, -100.0
  %v214 = vmul.f32 %v206, %v209
  %v215 = vsub.f32 1.0, %v206
  %v216 = vmul.f32 %v215, %v213
  %v217 = vadd.f32 %v214, %v216
  %v218 = vsub.f32 0.0, %v217
  %v219 = vlaneseq
  %v220 = vand.u32 %v219, 127
  %s221 = smul.u32 0, 128
  %v222 = vstv %s221
  %v223 = vadd.s32 %v222, %v220
  %vm224 = vcmp.lt.s32.totalorder %v223, 8
  %v225 = vsel %vm224, %v218, 0.0
  %226 = vst [vmem:[%s7] sm:$0x1] %v225
  // Predicated region
  $region26: #{mirt_forward.1} parent=0 // pred_check
    _
  $region27: #{mirt_forward.1} parent=0 // pred_check_branch
    %228 = sbr.rel (0) target = $region29
  $region28: #{mirt_forward.1} parent=0 // pred_region
    _
  $region29: #{mirt_forward.1} parent=0 // pred_fallthru
    _
  // Predicated region
  $region30: #{mirt_forward.1} parent=0 // pred_check
    _
  $region31: #{mirt_forward.1} parent=0 // pred_check_branch
    %230 = sbr.rel (0) target = $region33
  $region32: #{mirt_forward.1} parent=0 // pred_region
    _
  $region33: #{mirt_forward.1} parent=0 // pred_fallthru
    _
  // Predicated region
  $region34: #{mirt_forward.1} parent=0 // pred_check
    _
  $region35: #{mirt_forward.1} parent=0 // pred_check_branch
    %232 = sbr.rel (0) target = $region37
  $region36: #{mirt_forward.1} parent=0 // pred_region
    _
  $region37: #{mirt_forward.1} parent=0 // pred_fallthru
    _
  // Predicated region
  $region38: #{mirt_forward.1} parent=0 // pred_check
    _
  $region39: #{mirt_forward.1} parent=0 // pred_check_branch
    %234 = sbr.rel (0) target = $region41
  $region40: #{mirt_forward.1} parent=0 // pred_region
    _
  $region41: #{mirt_forward.1} parent=0 // pred_fallthru
    _

</llo_original>
